<compile_context>
chip_gen: v6e
topology: v6e:2x2x1
jax: 0.10.0
libtpu: 0.0.40
codegen_flags: <defaults>
</compile_context>

<pallas_src>
import jax
import jax.numpy as jnp
from jax.experimental import pallas as pl
from jax.experimental.pallas import tpu as pltpu

# Crop offsets from the PyTorch module: [:, :, 14:-14, 8:-8]
CROP_H = 14
CROP_W = 8


def _round_up(x, m):
    return (x + m - 1) // m * m


def _sublane_multiple(dtype):
    # 8 sublanes for 32-bit, 16 for 16-bit, 32 for 8-bit packed dtypes.
    return max(8, 32 // jnp.dtype(dtype).itemsize)


def _vmem_capacity_bytes():
    """Physical per-core VMEM; conservative default if the query fails."""
    try:
        info = pltpu.get_tpu_info()
        cap = getattr(info, "vmem_capacity_bytes", None)
        if cap:
            return int(cap)
    except Exception:
        pass
    return 64 << 20  # v7x per-TensorCore VMEM (smallest of the generations)


def _choose_slabs_per_step(nc, per_slab_in_bytes, per_slab_ws_bytes,
                           target_in_bytes, ws_cap_bytes, min_steps):
    """Largest divisor of nc whose (padding-aware) block obeys the per-step and
    working-set budgets while keeping >= min_steps grid steps, so both v7x
    TensorCores still have enough steps to double-buffer."""
    min_steps_eff = min(min_steps, nc)
    best = 1
    for d in range(1, nc + 1):
        if nc % d:
            continue
        if d * per_slab_in_bytes > target_in_bytes:
            break  # monotone in d
        if d * per_slab_ws_bytes > ws_cap_bytes:
            break
        if nc // d >= min_steps_eff:
            best = d
    return best


def _make_kernel(hc, wc, flat_out):
    def kernel(pred_ref, tgt_ref, o_ref):
        t = tgt_ref[...]
        p = pred_ref[...]
        diff = t - p
        sq = diff * diff
        # (t*m - p*m)**2 with m in {0,1}  ==  where(t > 0.001, (t-p)**2, 0).
        # Compare in f32 so the 0.001 threshold matches PyTorch's float scalar.
        mask = t.astype(jnp.float32) > jnp.float32(0.001)
        full = jnp.where(mask, sq, jnp.zeros_like(sq))
        # Single misaligned slice (offsets 14/8 are not (8,128)-aligned, so
        # this is the only relayout in the kernel).
        cropped = full[:, CROP_H:CROP_H + hc, CROP_W:CROP_W + wc]
        if flat_out:
            # Lane-dense store: dense hc*wc lanes instead of wc-lane stripes.
            o_ref[...] = cropped.reshape(cropped.shape[0], 1, hc * wc)
        else:
            o_ref[...] = cropped
    return kernel


def _pallas_mse(pred3, tgt3, hc, wc, bc, flat_out, vmem_limit):
    nc, h, w = pred3.shape
    dtype = pred3.dtype
    itemsize = jnp.dtype(dtype).itemsize

    in_spec = pl.BlockSpec((bc, h, w), lambda i: (i, 0, 0))
    if flat_out:
        out_shape = jax.ShapeDtypeStruct((nc, 1, hc * wc), dtype)
        out_spec = pl.BlockSpec((bc, 1, hc * wc), lambda i: (i, 0, 0))
    else:
        out_shape = jax.ShapeDtypeStruct((nc, hc, wc), dtype)
        out_spec = pl.BlockSpec((bc, hc, wc), lambda i: (i, 0, 0))

    # Bandwidth-bound elementwise op: tell XLA how many bytes actually move.
    cost = pl.CostEstimate(
        flops=4 * nc * h * w,
        transcendentals=0,
        bytes_accessed=(2 * nc * h * w + nc * hc * wc) * itemsize,
    )
    compiler_params = pltpu.CompilerParams(
        dimension_semantics=("parallel",),
        vmem_limit_bytes=vmem_limit,
    )

    return pl.pallas_call(
        _make_kernel(hc, wc, flat_out),
        out_shape=out_shape,
        grid_spec=pltpu.PrefetchScalarGridSpec(
            num_scalar_prefetch=0,
            grid=(nc // bc,),
            in_specs=[in_spec, in_spec],
            out_specs=out_spec,
        ),
        compiler_params=compiler_params,
        cost_estimate=cost,
    )(pred3, tgt3)


# shape signature -> True (lane-dense flat output lowered fine) / False (use 3-D)
_LAYOUT_CACHE = {}


def mse_loss(outputs, target):
    """outputs: tuple/list whose first element is NCHW; target: NCHW."""
    pred = outputs[0]
    assert pred.shape == target.shape, "outputs[0] and target must match in shape"
    n, c, h, w = pred.shape
    hc = h - 2 * CROP_H
    wc = w - 2 * CROP_W
    assert hc > 0 and wc > 0, "spatial dims too small for the 14/8 crop"

    nc = n * c
    dtype = pred.dtype
    itemsize = jnp.dtype(dtype).itemsize
    sub = _sublane_multiple(dtype)

    # Lane-dense flat output only pays off when the cropped width under-fills a
    # 128-lane row; for wide images the 3-D layout already writes dense rows.
    want_flat = wc < 128

    # (8,128)-padding-aware per-slab VMEM footprints.
    in_slab = _round_up(h, sub) * _round_up(w, 128) * itemsize
    out_slab_flat = sub * _round_up(hc * wc, 128) * itemsize
    out_slab_3d = _round_up(hc, sub) * _round_up(wc, 128) * itemsize
    out_slab = out_slab_flat if want_flat else out_slab_3d
    per_slab_ws = 4 * in_slab + 2 * out_slab  # 2 inputs x 2 buffers + 2 out buffers

    vmem_cap = _vmem_capacity_bytes()
    ws_cap = max(12 << 20, min(vmem_cap - (16 << 20), 100 << 20))
    headroom = 4 << 20

    bc = _choose_slabs_per_step(
        nc,
        per_slab_in_bytes=in_slab,
        per_slab_ws_bytes=per_slab_ws,
        target_in_bytes=8 << 20,
        ws_cap_bytes=max(ws_cap - headroom, 8 << 20),
        min_steps=8,
    )

    vmem_need = bc * per_slab_ws + headroom
    vmem_limit = int(min(vmem_need, vmem_cap)) if vmem_need > (16 << 20) else None

    # Flatten N,C into one contiguous leading axis (free reshape); last two
    # block dims stay full-extent, satisfying the (8,128) tiling rule.
    pred3 = pred.reshape(nc, h, w)
    tgt3 = target.reshape(nc, h, w)

    sig = (nc, h, w, str(jnp.dtype(dtype)))
    flat_ok = _LAYOUT_CACHE.get(sig)

    if want_flat and flat_ok is not False:
        try:
            res = _pallas_mse(pred3, tgt3, hc, wc, bc, True, vmem_limit)
            if flat_ok is None:
                # Surface any lowering / VMEM error once, then cache the choice.
                res = jax.block_until_ready(res)
                _LAYOUT_CACHE[sig] = True
            return res.reshape(n, c, hc, wc)
        except Exception:
            _LAYOUT_CACHE[sig] = False  # fall back to the proven 3-D layout

    res = _pallas_mse(pred3, tgt3, hc, wc, bc, False, vmem_limit)
    return res.reshape(n, c, hc, wc)


def mse_loss_ref(outputs, target):
    """Pure-JAX reference matching the PyTorch forward."""
    o = outputs[0][:, :, CROP_H:-CROP_H, CROP_W:-CROP_W]
    t = target[:, :, CROP_H:-CROP_H, CROP_W:-CROP_W]
    val = (t > 0.001).astype(t.dtype)
    loss = t * val - o * val
    return loss ** 2


if __name__ == "__main__":
    key = jax.random.PRNGKey(0)
    k1, k2 = jax.random.split(key)

    # Small NCHW shapes large enough to survive the [14:-14, 8:-8] crop.
    N, C, H, W = 2, 4, 48, 32
    pred = jax.random.normal(k1, (N, C, H, W), dtype=jnp.float32)
    # Mix of valid (>0.001) and invalid depth pixels in the target.
    target = jax.random.uniform(k2, (N, C, H, W), dtype=jnp.float32,
                                minval=-0.5, maxval=2.0)

    result = mse_loss((pred,), target)
    result = jax.block_until_ready(result)

    expected = mse_loss_ref((pred,), target)
    assert result.shape == (N, C, H - 2 * CROP_H, W - 2 * CROP_W)
    assert jnp.allclose(result, expected, atol=1e-6, rtol=1e-6)

    print("KERNEL_OK")
</pallas_src>

<mosaic_0001>
module attributes {stable_mosaic.version = 11 : i64} {
  func.func @kernel(%arg0: i32, %arg1: memref<1x48x32xf32, #tpu.memory_space<vmem>>, %arg2: memref<1x48x32xf32, #tpu.memory_space<vmem>>, %arg3: memref<1x1x320xf32, #tpu.memory_space<vmem>>) attributes {dimension_semantics = [#tpu.dimension_semantics<parallel>], iteration_bounds = array<i64: 8>, scalar_prefetch = 0 : i64, scratch_operands = 0 : i64, tpu.core_type = #tpu.core_type<tc>, window_params = [{transform_indices = @transform_0, window_bounds = array<i64: 1, 48, 32>}, {transform_indices = @transform_1, window_bounds = array<i64: 1, 48, 32>}, {transform_indices = @transform_2, window_bounds = array<i64: 1, 1, 320>}]} {
    %c0 = arith.constant 0 : index
    %c0_0 = arith.constant 0 : index
    %c0_1 = arith.constant 0 : index
    %0 = vector.load %arg2[%c0, %c0_0, %c0_1] : memref<1x48x32xf32, #tpu.memory_space<vmem>>, vector<1x48x32xf32>
    %c0_2 = arith.constant 0 : index
    %c0_3 = arith.constant 0 : index
    %c0_4 = arith.constant 0 : index
    %1 = vector.load %arg1[%c0_2, %c0_3, %c0_4] : memref<1x48x32xf32, #tpu.memory_space<vmem>>, vector<1x48x32xf32>
    %2 = arith.subf %0, %1 : vector<1x48x32xf32>
    %3 = arith.mulf %2, %2 : vector<1x48x32xf32>
    %cst = arith.constant 1.000000e-03 : f32
    %4 = vector.broadcast %cst : f32 to vector<1x48x32xf32>
    %5 = arith.cmpf ogt, %0, %4 : vector<1x48x32xf32>
    %cst_5 = arith.constant 0.000000e+00 : f32
    %6 = vector.broadcast %cst_5 : f32 to vector<1x48x32xf32>
    %7 = arith.select %5, %3, %6 : vector<1x48x32xi1>, vector<1x48x32xf32>
    %8 = vector.extract_strided_slice %7 {offsets = [0, 14, 8], sizes = [1, 20, 16], strides = [1, 1, 1]} : vector<1x48x32xf32> to vector<1x20x16xf32>
    %9 = vector.shape_cast %8 : vector<1x20x16xf32> to vector<1x1x320xf32>
    %c0_6 = arith.constant 0 : index
    %c0_7 = arith.constant 0 : index
    %c0_8 = arith.constant 0 : index
    %10 = vector.load %arg3[%c0_6, %c0_7, %c0_8] : memref<1x1x320xf32, #tpu.memory_space<vmem>>, vector<1x1x320xf32>
    tpu.vector_store %arg3[%c0_6, %c0_7, %c0_8], %9 {strides = array<i32>} : memref<1x1x320xf32, #tpu.memory_space<vmem>>, vector<1x1x320xf32>,
    return
  }
  func.func @transform_0(%arg0: i32) -> (i32, i32, i32) {
    %c0_i32 = arith.constant 0 : i32
    %c0_i32_0 = arith.constant 0 : i32
    %c0_i32_1 = arith.constant 0 : i32
    return %arg0, %c0_i32, %c0_i32_0 : i32, i32, i32
  }
  func.func @transform_1(%arg0: i32) -> (i32, i32, i32) {
    %c0_i32 = arith.constant 0 : i32
    %c0_i32_0 = arith.constant 0 : i32
    %c0_i32_1 = arith.constant 0 : i32
    return %arg0, %c0_i32, %c0_i32_0 : i32, i32, i32
  }
  func.func @transform_2(%arg0: i32) -> (i32, i32, i32) {
    %c0_i32 = arith.constant 0 : i32
    %c0_i32_0 = arith.constant 0 : i32
    %c0_i32_1 = arith.constant 0 : i32
    return %arg0, %c0_i32, %c0_i32_0 : i32, i32, i32
  }
}

module attributes {stable_mosaic.version = 11 : i64} {
  func.func @kernel(%arg0: i32, %arg1: memref<1x48x32xf32, #tpu.memory_space<vmem>>, %arg2: memref<1x48x32xf32, #tpu.memory_space<vmem>>, %arg3: memref<1x20x16xf32, #tpu.memory_space<vmem>>) attributes {dimension_semantics = [#tpu.dimension_semantics<parallel>], iteration_bounds = array<i64: 8>, scalar_prefetch = 0 : i64, scratch_operands = 0 : i64, tpu.core_type = #tpu.core_type<tc>, window_params = [{transform_indices = @transform_0, window_bounds = array<i64: 1, 48, 32>}, {transform_indices = @transform_1, window_bounds = array<i64: 1, 48, 32>}, {transform_indices = @transform_2, window_bounds = array<i64: 1, 20, 16>}]} {
    %c0 = arith.constant 0 : index
    %c0_0 = arith.constant 0 : index
    %c0_1 = arith.constant 0 : index
    %0 = vector.load %arg2[%c0, %c0_0, %c0_1] : memref<1x48x32xf32, #tpu.memory_space<vmem>>, vector<1x48x32xf32>
    %c0_2 = arith.constant 0 : index
    %c0_3 = arith.constant 0 : index
    %c0_4 = arith.constant 0 : index
    %1 = vector.load %arg1[%c0_2, %c0_3, %c0_4] : memref<1x48x32xf32, #tpu.memory_space<vmem>>, vector<1x48x32xf32>
    %2 = arith.subf %0, %1 : vector<1x48x32xf32>
    %3 = arith.mulf %2, %2 : vector<1x48x32xf32>
    %cst = arith.constant 1.000000e-03 : f32
    %4 = vector.broadcast %cst : f32 to vector<1x48x32xf32>
    %5 = arith.cmpf ogt, %0, %4 : vector<1x48x32xf32>
    %cst_5 = arith.constant 0.000000e+00 : f32
    %6 = vector.broadcast %cst_5 : f32 to vector<1x48x32xf32>
    %7 = arith.select %5, %3, %6 : vector<1x48x32xi1>, vector<1x48x32xf32>
    %8 = vector.extract_strided_slice %7 {offsets = [0, 14, 8], sizes = [1, 20, 16], strides = [1, 1, 1]} : vector<1x48x32xf32> to vector<1x20x16xf32>
    %c0_6 = arith.constant 0 : index
    %c0_7 = arith.constant 0 : index
    %c0_8 = arith.constant 0 : index
    %9 = vector.load %arg3[%c0_6, %c0_7, %c0_8] : memref<1x20x16xf32, #tpu.memory_space<vmem>>, vector<1x20x16xf32>
    tpu.vector_store %arg3[%c0_6, %c0_7, %c0_8], %8 {strides = array<i32>} : memref<1x20x16xf32, #tpu.memory_space<vmem>>, vector<1x20x16xf32>,
    return
  }
  func.func @transform_0(%arg0: i32) -> (i32, i32, i32) {
    %c0_i32 = arith.constant 0 : i32
    %c0_i32_0 = arith.constant 0 : i32
    %c0_i32_1 = arith.constant 0 : i32
    return %arg0, %c0_i32, %c0_i32_0 : i32, i32, i32
  }
  func.func @transform_1(%arg0: i32) -> (i32, i32, i32) {
    %c0_i32 = arith.constant 0 : i32
    %c0_i32_0 = arith.constant 0 : i32
    %c0_i32_1 = arith.constant 0 : i32
    return %arg0, %c0_i32, %c0_i32_0 : i32, i32, i32
  }
  func.func @transform_2(%arg0: i32) -> (i32, i32, i32) {
    %c0_i32 = arith.constant 0 : i32
    %c0_i32_0 = arith.constant 0 : i32
    %c0_i32_1 = arith.constant 0 : i32
    return %arg0, %c0_i32, %c0_i32_0 : i32, i32, i32
  }
}

</mosaic_0001>

<llo_original>
// kernel: tpu_custom_call.1
$region0: #{tpu_custom_call.1}
  #allocation0 [shape = 'u32[]', space=smem, size = 0x4, offset = 0x4, fixed_abs, tag = 'smem constant byte address 0x4 - core index']
  #allocation1 [shape = 'u32[144,128]{1,0:T(1,128)}', space=vmem, size = 0x12000, scoped, tag = 'internal scratch']
  %s0 = inlined_call_operand.vmem [shape: f32[8,48,32], index: 0, kind: input, shape index: {}]
  %s1 = inlined_call_operand.vmem [shape: f32[8,48,32], index: 1, kind: input, shape index: {}]
  %s2 = inlined_call_operand.hbm [shape: f32[8,1,320], index: 2, kind: output, shape index: {}]
  %s3 = sld [smem:[#allocation0]]
  $region41: #{tpu_custom_call.1} parent=0
    _
  %s5 = ssub.s32 1, %s3
  %s6 = scalar_select 0, %s5, %s3
  $region1: #{tpu_custom_call.1} parent=0
    #allocation2 [shape = 'u8[3072]{0}', space=vmem, size = 0xc00, scoped, tag = 'output window, operand 0']
    #allocation3 [shape = 's32[2]{0}', space=sflag, size = 0x8, scoped, tag = 'scoped memory for tpu_custom_call.1']
    %7 = vsyncpa [#allocation3], 0
    %s8 = scalar_lea.sflag [#allocation3], 1
    %9 = vsyncpa %s8, 0
    loop: start=0, step=1, limit=10
    $region2: #{tpu_custom_call.1} parent=1 // loop_pre_header
      _
    $region3: #{tpu_custom_call.1} parent=1 // loop_header
      %s11 = sphi 0, %s15
      %p12 = scmp.ge.s32.totalorder %s11, 10
      %s21 = sphi 0, %s23
      %s24 = sphi 0, %s21
      %s25 = sphi 0, %s24
      %s41 = sphi 0, %s25
      %s47 = sphi 0, %s49
      %s50 = sphi 0, %s47
      %s51 = sphi 0, %s50
      %s67 = sphi 0, %s51
      %s73 = sphi 0, %s75
      %s76 = sphi 0, %s73
      %s77 = sphi 0, %s76
      %s93 = sphi 0, %s77
    $region4: #{tpu_custom_call.1} parent=1 // loop_header_branch
      %14 = sbr.rel (%p12) target = $region8
    $region5: #{tpu_custom_call.1} parent=1 // loop_body
      %s16 = ssub.s32 %s11, 1
      %s17 = ssub.s32 %s11, 2
      %s18 = sadd.s32 %s11, 1
      %s19 = ssub.s32 %s11, %s18
      %p20 = scmp.eq.s32.totalorder %s19, 0
      %s22 = sadd.s32 %s21, 1
      %s23 = scalar_select %p20, %s21, %s22
      %p26 = pneg %p20
      %p27 = scmp.eq.s32.totalorder %s11, 7
      %p28 = por %p26, %p27
      %p29 = scmp.ne.s32.totalorder %s21, %s24
      %p30 = scmp.eq.s32.totalorder %s11, 0
      %p31 = por %p29, %p30
      %p32 = scmp.ne.s32.totalorder %s21, %s24
      %p33 = scmp.eq.s32.totalorder %s16, 7
      %p34 = por %p32, %p33
      %p35 = scmp.ne.s32.totalorder %s24, %s25
      %p36 = scmp.eq.s32.totalorder %s16, 0
      %p37 = por %p35, %p36
      %p38 = scmp.ne.s32.totalorder %s24, %s25
      %p39 = scmp.eq.s32.totalorder %s17, 7
      %p40 = por %p38, %p39
      %p42 = scmp.ne.s32.totalorder %s25, %s41
      %p43 = scmp.eq.s32.totalorder %s17, 0
      %p44 = por %p42, %p43
      %s45 = ssub.s32 %s11, %s18
      %p46 = scmp.eq.s32.totalorder %s45, 0
      %s48 = sadd.s32 %s47, 1
      %s49 = scalar_select %p46, %s47, %s48
      %p52 = pneg %p46
      %p53 = scmp.eq.s32.totalorder %s11, 7
      %p54 = por %p52, %p53
      %p55 = scmp.ne.s32.totalorder %s47, %s50
      %p56 = scmp.eq.s32.totalorder %s11, 0
      %p57 = por %p55, %p56
      %p58 = scmp.ne.s32.totalorder %s47, %s50
      %p59 = scmp.eq.s32.totalorder %s16, 7
      %p60 = por %p58, %p59
      %p61 = scmp.ne.s32.totalorder %s50, %s51
      %p62 = scmp.eq.s32.totalorder %s16, 0
      %p63 = por %p61, %p62
      %p64 = scmp.ne.s32.totalorder %s50, %s51
      %p65 = scmp.eq.s32.totalorder %s17, 7
      %p66 = por %p64, %p65
      %p68 = scmp.ne.s32.totalorder %s51, %s67
      %p69 = scmp.eq.s32.totalorder %s17, 0
      %p70 = por %p68, %p69
      %s71 = ssub.s32 %s11, %s18
      %p72 = scmp.eq.s32.totalorder %s71, 0
      %s74 = sadd.s32 %s73, 1
      %s75 = scalar_select %p72, %s73, %s74
      %p78 = pneg %p72
      %p79 = scmp.eq.s32.totalorder %s11, 7
      %p80 = por %p78, %p79
      %p81 = scmp.ne.s32.totalorder %s73, %s76
      %p82 = scmp.eq.s32.totalorder %s11, 0
      %p83 = por %p81, %p82
      %p84 = scmp.ne.s32.totalorder %s73, %s76
      %p85 = scmp.eq.s32.totalorder %s16, 7
      %p86 = por %p84, %p85
      %p87 = scmp.ne.s32.totalorder %s76, %s77
      %p88 = scmp.eq.s32.totalorder %s16, 0
      %p89 = por %p87, %p88
      %p90 = scmp.ne.s32.totalorder %s76, %s77
      %p91 = scmp.eq.s32.totalorder %s17, 7
      %p92 = por %p90, %p91
      %p94 = scmp.ne.s32.totalorder %s77, %s93
      %p95 = scmp.eq.s32.totalorder %s17, 0
      %p96 = por %p94, %p95
      %p97 = scmp.le.s32.totalorder 1, %s11
      %p98 = scmp.lt.s32.totalorder %s11, 9
      %p99 = pnand %p97, %p98
      %p100 = pneg %p99
      // Predicated region
      $region9: #{tpu_custom_call.1} parent=5 // pred_check
        _
      $region10: #{tpu_custom_call.1} parent=5 // pred_check_branch
        %102 = sbr.rel (%p99) target = $region12
      $region11: #{tpu_custom_call.1} parent=5 // pred_region
        %s103 = ssub.s32 %s11, 1
      $region12: #{tpu_custom_call.1} parent=5 // pred_fallthru
        _
      %p104 = scmp.lt.s32.totalorder %s11, 8
      // Predicated region
      $region13: #{tpu_custom_call.1} parent=5 // pred_check
        %p105 = pneg %p104
      $region14: #{tpu_custom_call.1} parent=5 // pred_check_branch
        %107 = sbr.rel (%p105) target = $region16
      $region15: #{tpu_custom_call.1} parent=5 // pred_region
        // Predicated region
        $region17: #{tpu_custom_call.1} parent=15 // pred_check
          %p108 = pneg %p31
        $region18: #{tpu_custom_call.1} parent=15 // pred_check_branch
          %110 = sbr.rel (%p108) target = $region20
        $region19: #{tpu_custom_call.1} parent=15 // pred_region
          %p111 = scmp.lt.s32.totalorder %s11, 7
          %s112 = scalar_select %p111, %s11, 7
          %s113 = smul.addr %s112, 6
          %s114 = smul.addr %s113, 8
          %s115 = scalar_lea.vmem %s0, %s114
        $region20: #{tpu_custom_call.1} parent=15 // pred_fallthru
          _
        // Predicated region
        $region21: #{tpu_custom_call.1} parent=15 // pred_check
          %p116 = pneg %p57
        $region22: #{tpu_custom_call.1} parent=15 // pred_check_branch
          %118 = sbr.rel (%p116) target = $region24
        $region23: #{tpu_custom_call.1} parent=15 // pred_region
          %p119 = scmp.lt.s32.totalorder %s11, 7
          %s120 = scalar_select %p119, %s11, 7
          %s121 = smul.addr %s120, 6
          %s122 = smul.addr %s121, 8
          %s123 = scalar_lea.vmem %s1, %s122
        $region24: #{tpu_custom_call.1} parent=15 // pred_fallthru
          _
      $region16: #{tpu_custom_call.1} parent=5 // pred_fallthru
        _
      %p124 = scmp.le.s32.totalorder 1, %s11
      %p125 = scmp.lt.s32.totalorder %s11, 9
      %p126 = pnand %p124, %p125
      %p127 = pneg %p126
      // Predicated region
      $region25: #{tpu_custom_call.1} parent=5 // pred_check
        _
      $region26: #{tpu_custom_call.1} parent=5 // pred_check_branch
        %129 = sbr.rel (%p126) target = $region28
      $region27: #{tpu_custom_call.1} parent=5 // pred_region
        %s130 = ssub.s32 %s11, 1
        %p131 = scmp.lt.s32.totalorder %s16, 7
        %s132 = scalar_select %p131, %s16, 7
        %s133 = smul.addr %s132, 6
        %s134 = smul.addr %s133, 8
        %s135 = scalar_lea.vmem %s0, %s134
        %p136 = pneg %p37
        %p137 = pneg %p34
        %p138 = scmp.lt.s32.totalorder %s16, 7
        %s139 = scalar_select %p138, %s16, 7
        %s140 = smul.addr %s139, 6
        %s141 = smul.addr %s140, 8
        %s142 = scalar_lea.vmem %s1, %s141
        %p143 = pneg %p63
        %p144 = pneg %p60
        %p145 = pneg %p89
        %p146 = pneg %p86
        %s147 = sand.u32 %s76, 1
        %s148 = scalar_lea.sflag [#allocation3], %s147
        %s149 = sand.u32 %s76, 1
        %s150 = smul.addr %s149, 3
        %s151 = scalar_lea.vmem [#allocation2], %s150
        %p152 = scmp.lt.s32.totalorder %s16, 7
        %s153 = scalar_select %p152, %s16, 7
        %s154 = smul.addr %s153, 6
        %s155 = smul.addr %s154, 8
        %s156 = scalar_lea.vmem %s0, %s155
        %p157 = scmp.lt.s32.totalorder %s16, 7
        %s158 = scalar_select %p157, %s16, 7
        %s159 = smul.addr %s158, 6
        %s160 = smul.addr %s159, 8
        %s161 = scalar_lea.vmem %s1, %s160
        %v162 = vld [vmem:[%s161 + $0x8] sm:$0xff]
        %v163 = vld [vmem:[%s161 + $0x10] sm:$0xff]
        %v164 = vld [vmem:[%s161 + $0x18] sm:$0xff]
        %v165 = vld [vmem:[%s161 + $0x20] sm:$0xff]
        %v166 = vld [vmem:[%s156 + $0x8] sm:$0xff]
        %v167 = vld [vmem:[%s156 + $0x10] sm:$0xff]
        %v168 = vld [vmem:[%s156 + $0x18] sm:$0xff]
        %v169 = vld [vmem:[%s156 + $0x20] sm:$0xff]
        %v170 = vsub.f32 %v162, %v166
        %v171 = vsub.f32 %v163, %v167
        %v172 = vsub.f32 %v164, %v168
        %v173 = vsub.f32 %v165, %v169
        %v174 = vmul.f32 %v170, %v170
        %v175 = vmul.f32 %v171, %v171
        %v176 = vmul.f32 %v172, %v172
        %v177 = vmul.f32 %v173, %v173
        %vm178 = vcmp.gt.f32.partialorder %v162, 0.001
        %vm179 = vcmp.gt.f32.partialorder %v163, 0.001
        %vm180 = vcmp.gt.f32.partialorder %v164, 0.001
        %vm181 = vcmp.gt.f32.partialorder %v165, 0.001
        %v182 = vsel %vm178, %v174, 0.0
        %v183 = vsel %vm179, %v175, 0.0
        %v184 = vsel %vm180, %v176, 0.0
        %v185 = vsel %vm181, %v177, 0.0
        %vm190 = vcmask 1041408
        %v191 = vrot.slane %v182, 6
        %v192 = vrot.slane %v183, 6
        %v193 = vsel %vm190, %v191, %v192
        %v194 = vrot.slane %v184, 6
        %v195 = vsel %vm190, %v192, %v194
        %v196 = vrot.slane %v185, 6
        %v197 = vsel %vm190, %v194, %v196
        %198 = vrot.lane.b32.xlu0 %v193, 120
        %v199 = vpop.permute.xlu0 %198
        %200 = vrot.lane.b32.xlu0 %v195, 120
        %v201 = vpop.permute.xlu0 %200
        %202 = vrot.lane.b32.xlu0 %v197, 120
        %v203 = vpop.permute.xlu0 %202
        %v206 = vcombine.high %v199, 0.0
        %v208 = vunpack.c.l.s4 1983009808
        %v209 = vunpack.c.0.s8 %v208
        %v210 = vlaneseq
        %v211 = vshrl.u32 %v210, 7
        %v212 = vsub.s32 %v209, %v211
        %v213 = vrot.slane %v199, %v212
        %v215 = vunpack.c.l.s4 1983009808
        %v216 = vunpack.c.0.s8 %v215
        %v217 = vlaneseq
        %v218 = vshrl.u32 %v217, 7
        %v219 = vsub.s32 %v216, %v218
        %v220 = vrot.slane %v206, %v219
        %v221 = vcombine.high %v213, 0.0
        %v223 = vunpack.c.l.s4 1934713408
        %v224 = vunpack.c.0.s8 %v223
        %v225 = vlaneseq
        %v226 = vshrl.u32 %v225, 7
        %v227 = vsub.s32 %v224, %v226
        %v228 = vrot.slane %v213, %v227
        %v230 = vunpack.c.l.s4 1934713408
        %v231 = vunpack.c.0.s8 %v230
        %v232 = vlaneseq
        %v233 = vshrl.u32 %v232, 7
        %v234 = vsub.s32 %v231, %v233
        %v235 = vrot.slane %v221, %v234
        %v236 = vcombine.high %v220, 0.0
        %v238 = vunpack.c.l.s4 1934713408
        %v239 = vunpack.c.0.s8 %v238
        %v240 = vlaneseq
        %v241 = vshrl.u32 %v240, 7
        %v242 = vsub.s32 %v239, %v241
        %v243 = vrot.slane %v220, %v242
        %v245 = vunpack.c.l.s4 1934713408
        %v246 = vunpack.c.0.s8 %v245
        %v247 = vlaneseq
        %v248 = vshrl.u32 %v247, 7
        %v249 = vsub.s32 %v246, %v248
        %v250 = vrot.slane %v236, %v249
        %v251 = vcombine.high %v228, 0.0
        %v252 = vcombine.high %v235, 0.0
        %v253 = vcombine.high %v243, 0.0
        %v254 = vcombine.high %v250, 0.0
        %v255 = vcombine.high %v201, 0.0
        %v257 = vunpack.c.l.s4 1983009808
        %v258 = vunpack.c.0.s8 %v257
        %v259 = vlaneseq
        %v260 = vshrl.u32 %v259, 7
        %v261 = vsub.s32 %v258, %v260
        %v262 = vrot.slane %v201, %v261
        %v264 = vunpack.c.l.s4 1983009808
        %v265 = vunpack.c.0.s8 %v264
        %v266 = vlaneseq
        %v267 = vshrl.u32 %v266, 7
        %v268 = vsub.s32 %v265, %v267
        %v269 = vrot.slane %v255, %v268
        %v270 = vcombine.high %v262, 0.0
        %v272 = vunpack.c.l.s4 1934713408
        %v273 = vunpack.c.0.s8 %v272
        %v274 = vlaneseq
        %v275 = vshrl.u32 %v274, 7
        %v276 = vsub.s32 %v273, %v275
        %v277 = vrot.slane %v262, %v276
        %v279 = vunpack.c.l.s4 1934713408
        %v280 = vunpack.c.0.s8 %v279
        %v281 = vlaneseq
        %v282 = vshrl.u32 %v281, 7
        %v283 = vsub.s32 %v280, %v282
        %v284 = vrot.slane %v270, %v283
        %v285 = vcombine.high %v269, 0.0
        %v287 = vunpack.c.l.s4 1934713408
        %v288 = vunpack.c.0.s8 %v287
        %v289 = vlaneseq
        %v290 = vshrl.u32 %v289, 7
        %v291 = vsub.s32 %v288, %v290
        %v292 = vrot.slane %v269, %v291
        %v294 = vunpack.c.l.s4 1934713408
        %v295 = vunpack.c.0.s8 %v294
        %v296 = vlaneseq
        %v297 = vshrl.u32 %v296, 7
        %v298 = vsub.s32 %v295, %v297
        %v299 = vrot.slane %v285, %v298
        %v300 = vcombine.high %v277, 0.0
        %v301 = vcombine.high %v284, 0.0
        %v302 = vcombine.high %v292, 0.0
        %v303 = vcombine.high %v299, 0.0
        %v306 = vunpack.c.l.s4 1983009808
        %v307 = vunpack.c.0.s8 %v306
        %v308 = vlaneseq
        %v309 = vshrl.u32 %v308, 7
        %v310 = vsub.s32 %v307, %v309
        %v311 = vrot.slane %v203, %v310
        %v312 = vcombine.high %v311, 0.0
        %v314 = vunpack.c.l.s4 1934713408
        %v315 = vunpack.c.0.s8 %v314
        %v316 = vlaneseq
        %v317 = vshrl.u32 %v316, 7
        %v318 = vsub.s32 %v315, %v317
        %v319 = vrot.slane %v311, %v318
        %v321 = vunpack.c.l.s4 1934713408
        %v322 = vunpack.c.0.s8 %v321
        %v323 = vlaneseq
        %v324 = vshrl.u32 %v323, 7
        %v325 = vsub.s32 %v322, %v324
        %v326 = vrot.slane %v312, %v325
        %v327 = vcombine.high %v319, 0.0
        %v328 = vcombine.high %v326, 0.0
        %330 = vrot.lane.b32.xlu0 %v251, 16
        %v331 = vpop.permute.xlu0 %330
        %334 = vrot.lane.b32.xlu0 %v235, 32
        %v335 = vpop.permute.xlu0 %334
        %338 = vrot.lane.b32.xlu0 %v252, 48
        %v339 = vpop.permute.xlu0 %338
        %342 = vrot.lane.b32.xlu0 %v243, 64
        %v343 = vpop.permute.xlu0 %342
        %346 = vrot.lane.b32.xlu0 %v253, 80
        %v347 = vpop.permute.xlu0 %346
        %350 = vrot.lane.b32.xlu0 %v250, 96
        %v351 = vpop.permute.xlu0 %350
        %354 = vrot.lane.b32.xlu0 %v254, 112
        %v355 = vpop.permute.xlu0 %354
        %358 = vrot.lane.b32.xlu0 %v300, 16
        %v359 = vpop.permute.xlu0 %358
        %362 = vrot.lane.b32.xlu0 %v284, 32
        %v363 = vpop.permute.xlu0 %362
        %366 = vrot.lane.b32.xlu0 %v301, 48
        %v367 = vpop.permute.xlu0 %366
        %370 = vrot.lane.b32.xlu0 %v292, 64
        %v371 = vpop.permute.xlu0 %370
        %374 = vrot.lane.b32.xlu0 %v302, 80
        %v375 = vpop.permute.xlu0 %374
        %378 = vrot.lane.b32.xlu0 %v299, 96
        %v379 = vpop.permute.xlu0 %378
        %382 = vrot.lane.b32.xlu0 %v303, 112
        %v383 = vpop.permute.xlu0 %382
        %386 = vrot.lane.b32.xlu0 %v327, 16
        %v387 = vpop.permute.xlu0 %386
        %390 = vrot.lane.b32.xlu0 %v326, 32
        %v391 = vpop.permute.xlu0 %390
        %394 = vrot.lane.b32.xlu0 %v328, 48
        %v395 = vpop.permute.xlu0 %394
        %vm397 = vcmask 130048
        %v398 = vsel %vm397, %v228, %v331
        %vm399 = vcmask 261120
        %v400 = vsel %vm399, %v398, %v335
        %vm401 = vcmask 392192
        %v402 = vsel %vm401, %v400, %v339
        %vm403 = vcmask 523264
        %v404 = vsel %vm403, %v402, %v343
        %vm405 = vcmask 654336
        %v406 = vsel %vm405, %v404, %v347
        %vm407 = vcmask 785408
        %v408 = vsel %vm407, %v406, %v351
        %vm409 = vcmask 916480
        %v410 = vsel %vm409, %v408, %v355
        %v411 = vsel %vm397, %v277, %v359
        %v412 = vsel %vm399, %v411, %v363
        %v413 = vsel %vm401, %v412, %v367
        %v414 = vsel %vm403, %v413, %v371
        %v415 = vsel %vm405, %v414, %v375
        %v416 = vsel %vm407, %v415, %v379
        %v417 = vsel %vm409, %v416, %v383
        %v418 = vsel %vm397, %v319, %v387
        %v419 = vsel %vm399, %v418, %v391
        %v420 = vsel %vm401, %v419, %v395
        %v424 = vcombine.low %v410, %v417
        %v426 = vunpack.c.l.s4 1966171168
        %v427 = vunpack.c.0.s8 %v426
        %v428 = vlaneseq
        %v429 = vshrl.u32 %v428, 7
        %v430 = vsub.s32 %v427, %v429
        %v431 = vrot.slane %v424, %v430
        %v433 = vunpack.c.l.s4 1966171168
        %v434 = vunpack.c.0.s8 %v433
        %v435 = vlaneseq
        %v436 = vshrl.u32 %v435, 7
        %v437 = vsub.s32 %v434, %v436
        %v438 = vrot.slane %v420, %v437
        %v439 = vcombine.low %v431, %v438
        %v441 = vunpack.c.l.s4 1966171168
        %v442 = vunpack.c.0.s8 %v441
        %v443 = vlaneseq
        %v444 = vshrl.u32 %v443, 7
        %v445 = vsub.s32 %v442, %v444
        %v446 = vrot.slane %v439, %v445
        %v448 = vlaneseq
        %vm449 = vcmp.ge.s32.totalorder %v448, 0
        %vm450 = vcmp.lt.s32.totalorder %v448, 320
        %vm451 = vmand %vm449, %vm450
        %452 = vst.msk [vmem:[%s151] sm:$0x7] %vm451, %v446
        %s453 = sand.u32 %s76, 1
        %s454 = scalar_lea.sflag [#allocation3], %s453
        %s455 = sand.u32 %s76, 1
        %s456 = smul.addr %s455, 3
        %s457 = scalar_lea.vmem [#allocation2], %s456
        // Predicated region
        $region29: #{tpu_custom_call.1} parent=27 // pred_check
          %p458 = pneg %p86
        $region30: #{tpu_custom_call.1} parent=27 // pred_check_branch
          %460 = sbr.rel (%p458) target = $region32
        $region31: #{tpu_custom_call.1} parent=27 // pred_region
          %s462 = ssub.s32 48, 48
          %463 = vsyncadd %s454, %s462
          %s464 = smul.addr %s16, 3
          %s465 = smul.addr %s464, 16
          %s466 = scalar_lea.hbm %s2, %s465
          %s468 = sshll.u32 %s457, 4
          %s469 = int_to_ptr.vmem [resolvable:$true] %s468
          %471 = dma.vmem_to_hbm [thread:$0]  %s469, 48, %s466, %s454
        $region32: #{tpu_custom_call.1} parent=27 // pred_fallthru
          _
      $region28: #{tpu_custom_call.1} parent=5 // pred_fallthru
        _
      %p472 = scmp.le.s32.totalorder 2, %s11
      // Predicated region
      $region33: #{tpu_custom_call.1} parent=5 // pred_check
        %p473 = pneg %p472
      $region34: #{tpu_custom_call.1} parent=5 // pred_check_branch
        %475 = sbr.rel (%p473) target = $region36
      $region35: #{tpu_custom_call.1} parent=5 // pred_region
        %s476 = ssub.s32 %s11, 2
        // Predicated region
        $region37: #{tpu_custom_call.1} parent=35 // pred_check
          %p477 = pneg %p92
        $region38: #{tpu_custom_call.1} parent=35 // pred_check_branch
          %479 = sbr.rel (%p477) target = $region40
        $region39: #{tpu_custom_call.1} parent=35 // pred_region
          %s480 = sand.u32 %s77, 1
          %s481 = scalar_lea.sflag [#allocation3], %s480
          %s482 = sand.u32 %s77, 1
          %s483 = smul.addr %s482, 3
          %s484 = scalar_lea.vmem [#allocation2], %s483
          %485 = dma.done %s481, 48
        $region40: #{tpu_custom_call.1} parent=35 // pred_fallthru
          _
      $region36: #{tpu_custom_call.1} parent=5 // pred_fallthru
        _
    $region6: #{tpu_custom_call.1} parent=1 // loop_footer
      %s15 = sadd.s32 1, %s11
    $region7: #{tpu_custom_call.1} parent=1 // loop_footer_branch
      %10 = sbr.rel target = $region3
    $region8: #{tpu_custom_call.1} parent=1 // loop_exit
      _
    %486 = vsyncpa [#allocation3], 1
    %s487 = scalar_lea.sflag [#allocation3], 1
    %488 = vsyncpa %s487, 1

// kernel: tpu_custom_call.1
$region0: #{tpu_custom_call.1}
  #allocation0 [shape = 'u32[]', space=smem, size = 0x4, offset = 0x4, fixed_abs, tag = 'smem constant byte address 0x4 - core index']
  #allocation1 [shape = 'u32[144,128]{1,0:T(1,128)}', space=vmem, size = 0x12000, scoped, tag = 'internal scratch']
  %s0 = inlined_call_operand.vmem [shape: f32[8,48,32], index: 0, kind: input, shape index: {}]
  %s1 = inlined_call_operand.vmem [shape: f32[8,48,32], index: 1, kind: input, shape index: {}]
  %s2 = inlined_call_operand.vmem [shape: f32[8,20,16], index: 2, kind: output, shape index: {}]
  %s3 = sld [smem:[#allocation0]]
  $region41: #{tpu_custom_call.1} parent=0
    _
  %s5 = ssub.s32 1, %s3
  %s6 = scalar_select 0, %s5, %s3
  loop: start=0, step=1, limit=10
  $region2: #{tpu_custom_call.1} parent=0 // loop_pre_header
    _
  $region3: #{tpu_custom_call.1} parent=0 // loop_header
    %s8 = sphi 0, %s12
    %p9 = scmp.ge.s32.totalorder %s8, 10
    %s18 = sphi 0, %s20
    %s21 = sphi 0, %s18
    %s22 = sphi 0, %s21
    %s38 = sphi 0, %s22
    %s44 = sphi 0, %s46
    %s47 = sphi 0, %s44
    %s48 = sphi 0, %s47
    %s64 = sphi 0, %s48
    %s70 = sphi 0, %s72
    %s73 = sphi 0, %s70
    %s74 = sphi 0, %s73
    %s90 = sphi 0, %s74
  $region4: #{tpu_custom_call.1} parent=0 // loop_header_branch
    %11 = sbr.rel (%p9) target = $region8
  $region5: #{tpu_custom_call.1} parent=0 // loop_body
    %s13 = ssub.s32 %s8, 1
    %s14 = ssub.s32 %s8, 2
    %s15 = sadd.s32 %s8, 1
    %s16 = ssub.s32 %s8, %s15
    %p17 = scmp.eq.s32.totalorder %s16, 0
    %s19 = sadd.s32 %s18, 1
    %s20 = scalar_select %p17, %s18, %s19
    %p23 = pneg %p17
    %p24 = scmp.eq.s32.totalorder %s8, 7
    %p25 = por %p23, %p24
    %p26 = scmp.ne.s32.totalorder %s18, %s21
    %p27 = scmp.eq.s32.totalorder %s8, 0
    %p28 = por %p26, %p27
    %p29 = scmp.ne.s32.totalorder %s18, %s21
    %p30 = scmp.eq.s32.totalorder %s13, 7
    %p31 = por %p29, %p30
    %p32 = scmp.ne.s32.totalorder %s21, %s22
    %p33 = scmp.eq.s32.totalorder %s13, 0
    %p34 = por %p32, %p33
    %p35 = scmp.ne.s32.totalorder %s21, %s22
    %p36 = scmp.eq.s32.totalorder %s14, 7
    %p37 = por %p35, %p36
    %p39 = scmp.ne.s32.totalorder %s22, %s38
    %p40 = scmp.eq.s32.totalorder %s14, 0
    %p41 = por %p39, %p40
    %s42 = ssub.s32 %s8, %s15
    %p43 = scmp.eq.s32.totalorder %s42, 0
    %s45 = sadd.s32 %s44, 1
    %s46 = scalar_select %p43, %s44, %s45
    %p49 = pneg %p43
    %p50 = scmp.eq.s32.totalorder %s8, 7
    %p51 = por %p49, %p50
    %p52 = scmp.ne.s32.totalorder %s44, %s47
    %p53 = scmp.eq.s32.totalorder %s8, 0
    %p54 = por %p52, %p53
    %p55 = scmp.ne.s32.totalorder %s44, %s47
    %p56 = scmp.eq.s32.totalorder %s13, 7
    %p57 = por %p55, %p56
    %p58 = scmp.ne.s32.totalorder %s47, %s48
    %p59 = scmp.eq.s32.totalorder %s13, 0
    %p60 = por %p58, %p59
    %p61 = scmp.ne.s32.totalorder %s47, %s48
    %p62 = scmp.eq.s32.totalorder %s14, 7
    %p63 = por %p61, %p62
    %p65 = scmp.ne.s32.totalorder %s48, %s64
    %p66 = scmp.eq.s32.totalorder %s14, 0
    %p67 = por %p65, %p66
    %s68 = ssub.s32 %s8, %s15
    %p69 = scmp.eq.s32.totalorder %s68, 0
    %s71 = sadd.s32 %s70, 1
    %s72 = scalar_select %p69, %s70, %s71
    %p75 = pneg %p69
    %p76 = scmp.eq.s32.totalorder %s8, 7
    %p77 = por %p75, %p76
    %p78 = scmp.ne.s32.totalorder %s70, %s73
    %p79 = scmp.eq.s32.totalorder %s8, 0
    %p80 = por %p78, %p79
    %p81 = scmp.ne.s32.totalorder %s70, %s73
    %p82 = scmp.eq.s32.totalorder %s13, 7
    %p83 = por %p81, %p82
    %p84 = scmp.ne.s32.totalorder %s73, %s74
    %p85 = scmp.eq.s32.totalorder %s13, 0
    %p86 = por %p84, %p85
    %p87 = scmp.ne.s32.totalorder %s73, %s74
    %p88 = scmp.eq.s32.totalorder %s14, 7
    %p89 = por %p87, %p88
    %p91 = scmp.ne.s32.totalorder %s74, %s90
    %p92 = scmp.eq.s32.totalorder %s14, 0
    %p93 = por %p91, %p92
    %p94 = scmp.le.s32.totalorder 1, %s8
    %p95 = scmp.lt.s32.totalorder %s8, 9
    %p96 = pnand %p94, %p95
    %p97 = pneg %p96
    // Predicated region
    $region9: #{tpu_custom_call.1} parent=5 // pred_check
      _
    $region10: #{tpu_custom_call.1} parent=5 // pred_check_branch
      %99 = sbr.rel (%p96) target = $region12
    $region11: #{tpu_custom_call.1} parent=5 // pred_region
      %s100 = ssub.s32 %s8, 1
    $region12: #{tpu_custom_call.1} parent=5 // pred_fallthru
      _
    %p101 = scmp.lt.s32.totalorder %s8, 8
    // Predicated region
    $region13: #{tpu_custom_call.1} parent=5 // pred_check
      %p102 = pneg %p101
    $region14: #{tpu_custom_call.1} parent=5 // pred_check_branch
      %104 = sbr.rel (%p102) target = $region16
    $region15: #{tpu_custom_call.1} parent=5 // pred_region
      // Predicated region
      $region17: #{tpu_custom_call.1} parent=15 // pred_check
        %p105 = pneg %p28
      $region18: #{tpu_custom_call.1} parent=15 // pred_check_branch
        %107 = sbr.rel (%p105) target = $region20
      $region19: #{tpu_custom_call.1} parent=15 // pred_region
        %p108 = scmp.lt.s32.totalorder %s8, 7
        %s109 = scalar_select %p108, %s8, 7
        %s110 = smul.addr %s109, 6
        %s111 = smul.addr %s110, 8
        %s112 = scalar_lea.vmem %s0, %s111
      $region20: #{tpu_custom_call.1} parent=15 // pred_fallthru
        _
      // Predicated region
      $region21: #{tpu_custom_call.1} parent=15 // pred_check
        %p113 = pneg %p54
      $region22: #{tpu_custom_call.1} parent=15 // pred_check_branch
        %115 = sbr.rel (%p113) target = $region24
      $region23: #{tpu_custom_call.1} parent=15 // pred_region
        %p116 = scmp.lt.s32.totalorder %s8, 7
        %s117 = scalar_select %p116, %s8, 7
        %s118 = smul.addr %s117, 6
        %s119 = smul.addr %s118, 8
        %s120 = scalar_lea.vmem %s1, %s119
      $region24: #{tpu_custom_call.1} parent=15 // pred_fallthru
        _
    $region16: #{tpu_custom_call.1} parent=5 // pred_fallthru
      _
    %p121 = scmp.le.s32.totalorder 1, %s8
    %p122 = scmp.lt.s32.totalorder %s8, 9
    %p123 = pnand %p121, %p122
    %p124 = pneg %p123
    // Predicated region
    $region25: #{tpu_custom_call.1} parent=5 // pred_check
      _
    $region26: #{tpu_custom_call.1} parent=5 // pred_check_branch
      %126 = sbr.rel (%p123) target = $region28
    $region27: #{tpu_custom_call.1} parent=5 // pred_region
      %s127 = ssub.s32 %s8, 1
      %p128 = scmp.lt.s32.totalorder %s13, 7
      %s129 = scalar_select %p128, %s13, 7
      %s130 = smul.addr %s129, 6
      %s131 = smul.addr %s130, 8
      %s132 = scalar_lea.vmem %s0, %s131
      %p133 = pneg %p34
      %p134 = pneg %p31
      %p135 = scmp.lt.s32.totalorder %s13, 7
      %s136 = scalar_select %p135, %s13, 7
      %s137 = smul.addr %s136, 6
      %s138 = smul.addr %s137, 8
      %s139 = scalar_lea.vmem %s1, %s138
      %p140 = pneg %p60
      %p141 = pneg %p57
      %p142 = pneg %p86
      %p143 = pneg %p83
      %p144 = scmp.lt.s32.totalorder %s13, 7
      %s145 = scalar_select %p144, %s13, 7
      %s146 = smul.addr %s145, 3
      %s147 = smul.addr %s146, 8
      %s148 = scalar_lea.vmem %s2, %s147
      %p149 = scmp.lt.s32.totalorder %s13, 7
      %s150 = scalar_select %p149, %s13, 7
      %s151 = smul.addr %s150, 6
      %s152 = smul.addr %s151, 8
      %s153 = scalar_lea.vmem %s0, %s152
      %p154 = scmp.lt.s32.totalorder %s13, 7
      %s155 = scalar_select %p154, %s13, 7
      %s156 = smul.addr %s155, 6
      %s157 = smul.addr %s156, 8
      %s158 = scalar_lea.vmem %s1, %s157
      %p159 = scmp.lt.s32.totalorder %s13, 7
      %s160 = scalar_select %p159, %s13, 7
      %s161 = smul.addr %s160, 3
      %s162 = smul.addr %s161, 8
      %s163 = scalar_lea.vmem %s2, %s162
      %v164 = vld [vmem:[%s158 + $0x8] sm:$0xff]
      %v165 = vld [vmem:[%s158 + $0x10] sm:$0xff]
      %v166 = vld [vmem:[%s158 + $0x18] sm:$0xff]
      %v167 = vld [vmem:[%s158 + $0x20] sm:$0xff]
      %v168 = vld [vmem:[%s153 + $0x8] sm:$0xff]
      %v169 = vld [vmem:[%s153 + $0x10] sm:$0xff]
      %v170 = vld [vmem:[%s153 + $0x18] sm:$0xff]
      %v171 = vld [vmem:[%s153 + $0x20] sm:$0xff]
      %v172 = vsub.f32 %v164, %v168
      %v173 = vsub.f32 %v165, %v169
      %v174 = vsub.f32 %v166, %v170
      %v175 = vsub.f32 %v167, %v171
      %v176 = vmul.f32 %v172, %v172
      %v177 = vmul.f32 %v173, %v173
      %v178 = vmul.f32 %v174, %v174
      %v179 = vmul.f32 %v175, %v175
      %vm180 = vcmp.gt.f32.partialorder %v164, 0.001
      %vm181 = vcmp.gt.f32.partialorder %v165, 0.001
      %vm182 = vcmp.gt.f32.partialorder %v166, 0.001
      %vm183 = vcmp.gt.f32.partialorder %v167, 0.001
      %v184 = vsel %vm180, %v176, 0.0
      %v185 = vsel %vm181, %v177, 0.0
      %v186 = vsel %vm182, %v178, 0.0
      %v187 = vsel %vm183, %v179, 0.0
      %192 = vrot.lane.b32.xlu0 %v184, 120
      %v193 = vpop.permute.xlu0 %192
      %194 = vrot.lane.b32.xlu0 %v185, 120
      %v195 = vpop.permute.xlu0 %194
      %196 = vrot.lane.b32.xlu0 %v186, 120
      %v197 = vpop.permute.xlu0 %196
      %198 = vrot.lane.b32.xlu0 %v187, 120
      %v199 = vpop.permute.xlu0 %198
      %vm204 = vcmask 130054
      %205 = vst.msk [vmem:[%s163 - $0x6] sm:$0xc0] %vm204, %v193
      %vm206 = vcmask 130048
      %207 = vst.msk [vmem:[%s163 + $0x2] sm:$0xff] %vm206, %v195
      %208 = vst.msk [vmem:[%s163 + $0xa] sm:$0xff] %vm206, %v197
      %vm209 = vcmask 123904
      %210 = vst.msk [vmem:[%s163 + $0x12] sm:$0x3] %vm209, %v199
      %p211 = scmp.lt.s32.totalorder %s13, 7
      %s212 = scalar_select %p211, %s13, 7
      %s213 = smul.addr %s212, 3
      %s214 = smul.addr %s213, 8
      %s215 = scalar_lea.vmem %s2, %s214
      // Predicated region
      $region29: #{tpu_custom_call.1} parent=27 // pred_check
        %p216 = pneg %p83
      $region30: #{tpu_custom_call.1} parent=27 // pred_check_branch
        %218 = sbr.rel (%p216) target = $region32
      $region31: #{tpu_custom_call.1} parent=27 // pred_region
        _
      $region32: #{tpu_custom_call.1} parent=27 // pred_fallthru
        _
    $region28: #{tpu_custom_call.1} parent=5 // pred_fallthru
      _
    %p219 = scmp.le.s32.totalorder 2, %s8
    // Predicated region
    $region33: #{tpu_custom_call.1} parent=5 // pred_check
      %p220 = pneg %p219
    $region34: #{tpu_custom_call.1} parent=5 // pred_check_branch
      %222 = sbr.rel (%p220) target = $region36
    $region35: #{tpu_custom_call.1} parent=5 // pred_region
      %s223 = ssub.s32 %s8, 2
      // Predicated region
      $region37: #{tpu_custom_call.1} parent=35 // pred_check
        %p224 = pneg %p89
      $region38: #{tpu_custom_call.1} parent=35 // pred_check_branch
        %226 = sbr.rel (%p224) target = $region40
      $region39: #{tpu_custom_call.1} parent=35 // pred_region
        %p227 = scmp.lt.s32.totalorder %s14, 7
        %s228 = scalar_select %p227, %s14, 7
        %s229 = smul.addr %s228, 3
        %s230 = smul.addr %s229, 8
        %s231 = scalar_lea.vmem %s2, %s230
      $region40: #{tpu_custom_call.1} parent=35 // pred_fallthru
        _
    $region36: #{tpu_custom_call.1} parent=5 // pred_fallthru
      _
  $region6: #{tpu_custom_call.1} parent=0 // loop_footer
    %s12 = sadd.s32 1, %s8
  $region7: #{tpu_custom_call.1} parent=0 // loop_footer_branch
    %7 = sbr.rel target = $region3
  $region8: #{tpu_custom_call.1} parent=0 // loop_exit
    _

</llo_original>
